<compile_context>
chip_gen: v7x
topology: tpu7x:2x2x1
jax: 0.10.0
libtpu: 0.0.40
codegen_flags: <defaults>
</compile_context>

<pallas_src>
import functools

import jax
import jax.numpy as jnp
from jax.experimental import pallas as pl
from jax.experimental.pallas import tpu as pltpu


def _cdiv(a, b):
    return -(-a // b)


def se_kernel(x_ref, w1_ref, w2_ref, o_ref, *, inv_hw, use_mxu):
    """One grid step over a (Bt, C, HW) batch-tile of flattened images.

    x_ref : (Bt, C, HW)  input tile (last dim is the full H*W; masked stores
                         when HW is not a multiple of 128)
    w1_ref: (Cr, C)      fc[0] 1x1-conv weight (C -> C//r, no bias)
    w2_ref: (C, Cr)      fc[2] 1x1-conv weight (C//r -> C, no bias)
    o_ref : (Bt, C, HW)  output tile
    """
    # --- Squeeze (AdaptiveAvgPool2d(1)): lane reduce, f32 accumulation -----
    # No full-tile f32 copy is materialized before the reduce.
    pooled = jnp.sum(x_ref[...], axis=-1, dtype=jnp.float32) * inv_hw   # (Bt, C)

    w1 = w1_ref[...].astype(jnp.float32)                                # (Cr, C)
    w2 = w2_ref[...].astype(jnp.float32)                                # (C, Cr)

    # --- Excitation MLP: Conv1x1 -> ReLU -> Conv1x1 -> Sigmoid -------------
    if use_mxu:
        # SE-typical channel counts: use the otherwise-idle MXU.
        h = jax.lax.dot_general(pooled, w1, (((1,), (1,)), ((), ())),
                                preferred_element_type=jnp.float32,
                                precision=jax.lax.Precision.HIGHEST)    # (Bt, Cr)
        h = jnp.maximum(h, 0.0)
        y = jax.lax.dot_general(h, w2, (((1,), (1,)), ((), ())),
                                preferred_element_type=jnp.float32,
                                precision=jax.lax.Precision.HIGHEST)    # (Bt, C)
    else:
        # Tiny channel counts: broadcast-multiply + lane reduce (VPU/XLU).
        h = jnp.sum(pooled[:, None, :] * w1[None, :, :], axis=-1)       # (Bt, Cr)
        h = jnp.maximum(h, 0.0)
        y = jnp.sum(h[:, None, :] * w2[None, :, :], axis=-1)            # (Bt, C)
    y = jax.nn.sigmoid(y)                                               # (Bt, C) f32

    # --- Scale: re-read x from VMEM (tile never live across the FC math), --
    # cast y once, multiply in the input dtype, lane-major store.
    y_cast = y.astype(o_ref.dtype)
    o_ref[...] = (x_ref[...] * y_cast[:, :, None]).astype(o_ref.dtype)


def _tpu_tiling_params():
    """Generation-aware (target block bytes, VMEM clamp, min grid steps)."""
    kind = ""
    try:
        kind = jax.devices()[0].device_kind.lower()
    except Exception:
        pass
    if "v7" in kind:
        # v7x: 64 MiB VMEM per TensorCore; 2 TCs share the parallel grid axis.
        return 8 << 20, 48 << 20, 4
    if any(tag in kind for tag in ("v4", "v5", "v6")):
        # 128 MiB physical VMEM, single TensorCore per chip.
        return 14 << 20, 100 << 20, 2
    # Unknown hardware: conservative numbers that fit every generation.
    return 8 << 20, 48 << 20, 2


def _vmem_bytes_2d(rows, cols, itemsize):
    sub_mult = max(8, 32 // itemsize)            # f32 -> 8, bf16 -> 16, int8 -> 32
    return (_cdiv(rows, sub_mult) * sub_mult) * (_cdiv(cols, 128) * 128) * itemsize


def se_layer(x, w1, w2):
    """SELayer forward.  x: (B, C, H, W); w1: (C//r, C); w2: (C, C//r)."""
    B, C, H, W = x.shape
    Cr = w1.shape[0]
    HW = H * W

    # Free reshape only — no pad / trailing-slice passes (each would be an
    # extra full-tensor HBM read+write in XLA).
    x2 = x.reshape(B, C, HW)

    target_block_bytes, vmem_cap, min_steps = _tpu_tiling_params()

    # VMEM footprint per image, including (sublane, lane) layout padding.
    itemsize = jnp.dtype(x.dtype).itemsize
    per_image_vmem = _vmem_bytes_2d(C, HW, itemsize)

    # Batch tile: as large as the target allows, while keeping >= min_steps
    # grid steps (>= 2 per TensorCore on v7x) whenever B permits.  The grid is
    # cdiv(B, bt); out-of-range rows of the last block are naturally dropped.
    max_bt = max(1, target_block_bytes // max(per_image_vmem, 1))
    steps = min(max(min_steps, _cdiv(B, max_bt)), B)
    bt = _cdiv(B, steps)
    grid = _cdiv(B, bt)

    # Double-buffered input + output ~ 4x block bytes, plus weights and slack.
    # TODO(synk): add a spatially-tiled two-pass path if a single image ever
    # exceeds the per-generation VMEM cap.
    w_item = jnp.dtype(w1.dtype).itemsize
    block_vmem = bt * per_image_vmem
    w_vmem = 2 * (_vmem_bytes_2d(Cr, C, w_item) + _vmem_bytes_2d(C, Cr, w_item))
    vmem_limit = int(min(max(4 * block_vmem + w_vmem + (2 << 20), 16 << 20), vmem_cap))

    kernel = functools.partial(se_kernel, inv_hw=1.0 / float(HW), use_mxu=(C >= 128))

    out = pl.pallas_call(
        kernel,
        out_shape=jax.ShapeDtypeStruct((B, C, HW), x.dtype),
        grid=(grid,),
        in_specs=[
            # Bt flattened images per grid step; full C and full HW.
            pl.BlockSpec((bt, C, HW), lambda b: (b, 0, 0)),
            # Weights: full (tiny) arrays, same block every step.
            pl.BlockSpec((Cr, C), lambda b: (0, 0)),
            pl.BlockSpec((C, Cr), lambda b: (0, 0)),
        ],
        out_specs=pl.BlockSpec((bt, C, HW), lambda b: (b, 0, 0)),
        compiler_params=pltpu.CompilerParams(
            dimension_semantics=("parallel",),
            vmem_limit_bytes=vmem_limit,
        ),
    )(x2, w1, w2)

    return out.reshape(B, C, H, W)


def se_layer_ref(x, w1, w2):
    """Pure-JAX reference mirroring the PyTorch forward (f32 math)."""
    xf = x.astype(jnp.float32)
    pooled = jnp.mean(xf, axis=(2, 3))                                   # (B, C)
    h = jnp.maximum(jnp.dot(pooled, w1.astype(jnp.float32).T,
                            precision=jax.lax.Precision.HIGHEST), 0.0)   # (B, Cr)
    y = jax.nn.sigmoid(jnp.dot(h, w2.astype(jnp.float32).T,
                               precision=jax.lax.Precision.HIGHEST))     # (B, C)
    return (xf * y[:, :, None, None]).astype(x.dtype)


if __name__ == "__main__":
    def run_case(key, B, C, H, W, reduction):
        Cr = C // reduction
        kx, k1, k2 = jax.random.split(key, 3)
        x = jax.random.normal(kx, (B, C, H, W), dtype=jnp.float32)
        w1 = jax.random.normal(k1, (Cr, C), dtype=jnp.float32) * (2.0 / C) ** 0.5
        w2 = jax.random.normal(k2, (C, Cr), dtype=jnp.float32) * (2.0 / Cr) ** 0.5
        out = jax.block_until_ready(se_layer(x, w1, w2))
        ref = se_layer_ref(x, w1, w2)
        assert out.shape == (B, C, H, W)
        assert jnp.allclose(out, ref, atol=1e-4, rtol=1e-4), (B, C, H, W, reduction)

    k1, k2, k3 = jax.random.split(jax.random.PRNGKey(0), 3)
    # Primary spec shape: lane-dense H*W, tiny C -> VPU excitation path.
    run_case(k1, B=2, C=4, H=16, W=16, reduction=2)
    # H*W not a multiple of 128 and batch not divisible by the tile:
    # exercises masked stores and the cdiv grid (no pad/slice passes).
    run_case(k2, B=3, C=8, H=9, W=9, reduction=4)
    # SE-typical channel count -> MXU excitation path.
    run_case(k3, B=2, C=256, H=16, W=16, reduction=4)

    print("KERNEL_OK")
</pallas_src>

<mosaic_0001>
module attributes {stable_mosaic.version = 11 : i64} {
  func.func @se_kernel(%arg0: i32, %arg1: memref<1x4x256xf32, #tpu.memory_space<vmem>>, %arg2: memref<2x4xf32, #tpu.memory_space<vmem>>, %arg3: memref<4x2xf32, #tpu.memory_space<vmem>>, %arg4: memref<1x4x256xf32, #tpu.memory_space<vmem>>) attributes {dimension_semantics = [#tpu.dimension_semantics<parallel>], iteration_bounds = array<i64: 2>, scalar_prefetch = 0 : i64, scratch_operands = 0 : i64, tpu.core_type = #tpu.core_type<tc>, window_params = [{transform_indices = @transform_0, window_bounds = array<i64: 1, 4, 256>}, {pipeline_mode = #tpu.pipeline_mode<synchronous>, transform_indices = @transform_1, window_bounds = array<i64: 2, 4>}, {pipeline_mode = #tpu.pipeline_mode<synchronous>, transform_indices = @transform_2, window_bounds = array<i64: 4, 2>}, {transform_indices = @transform_3, window_bounds = array<i64: 1, 4, 256>}]} {
    %c0 = arith.constant 0 : index
    %c0_0 = arith.constant 0 : index
    %c0_1 = arith.constant 0 : index
    %0 = vector.load %arg1[%c0, %c0_0, %c0_1] : memref<1x4x256xf32, #tpu.memory_space<vmem>>, vector<1x4x256xf32>
    %cst = arith.constant dense<0.000000e+00> : vector<1x4xf32>
    %1 = vector.multi_reduction <add>, %0, %cst [2] : vector<1x4x256xf32> to vector<1x4xf32>
    %cst_2 = arith.constant 3.906250e-03 : f32
    %2 = vector.broadcast %cst_2 : f32 to vector<1x4xf32>
    %3 = arith.mulf %1, %2 : vector<1x4xf32>
    %c0_3 = arith.constant 0 : index
    %c0_4 = arith.constant 0 : index
    %4 = vector.load %arg2[%c0_3, %c0_4] : memref<2x4xf32, #tpu.memory_space<vmem>>, vector<2x4xf32>
    %c0_5 = arith.constant 0 : index
    %c0_6 = arith.constant 0 : index
    %5 = vector.load %arg3[%c0_5, %c0_6] : memref<4x2xf32, #tpu.memory_space<vmem>>, vector<4x2xf32>
    %6 = vector.shape_cast %3 : vector<1x4xf32> to vector<1x1x4xf32>
    %7 = vector.shape_cast %4 : vector<2x4xf32> to vector<1x2x4xf32>
    %8 = vector.broadcast %6 : vector<1x1x4xf32> to vector<1x2x4xf32>
    %9 = arith.mulf %8, %7 : vector<1x2x4xf32>
    %cst_7 = arith.constant dense<0.000000e+00> : vector<1x2xf32>
    %10 = vector.multi_reduction <add>, %9, %cst_7 [2] : vector<1x2x4xf32> to vector<1x2xf32>
    %cst_8 = arith.constant 0.000000e+00 : f32
    %11 = vector.broadcast %cst_8 : f32 to vector<1x2xf32>
    %12 = arith.maximumf %10, %11 : vector<1x2xf32>
    %13 = vector.shape_cast %12 : vector<1x2xf32> to vector<1x1x2xf32>
    %14 = vector.shape_cast %5 : vector<4x2xf32> to vector<1x4x2xf32>
    %15 = vector.broadcast %13 : vector<1x1x2xf32> to vector<1x4x2xf32>
    %16 = arith.mulf %15, %14 : vector<1x4x2xf32>
    %cst_9 = arith.constant dense<0.000000e+00> : vector<1x4xf32>
    %17 = vector.multi_reduction <add>, %16, %cst_9 [2] : vector<1x4x2xf32> to vector<1x4xf32>
    %18 = arith.negf %17 : vector<1x4xf32>
    %19 = math.exp %18 : vector<1x4xf32>
    %cst_10 = arith.constant 1.000000e+00 : f32
    %20 = vector.broadcast %cst_10 : f32 to vector<1x4xf32>
    %21 = arith.addf %20, %19 : vector<1x4xf32>
    %22 = arith.divf %20, %21 : vector<1x4xf32>
    %c0_11 = arith.constant 0 : index
    %c0_12 = arith.constant 0 : index
    %c0_13 = arith.constant 0 : index
    %23 = vector.load %arg1[%c0_11, %c0_12, %c0_13] : memref<1x4x256xf32, #tpu.memory_space<vmem>>, vector<1x4x256xf32>
    %24 = vector.shape_cast %22 : vector<1x4xf32> to vector<1x4x1xf32>
    %25 = vector.broadcast %24 : vector<1x4x1xf32> to vector<1x4x256xf32>
    %26 = arith.mulf %23, %25 : vector<1x4x256xf32>
    %c0_14 = arith.constant 0 : index
    %c0_15 = arith.constant 0 : index
    %c0_16 = arith.constant 0 : index
    %27 = vector.load %arg4[%c0_14, %c0_15, %c0_16] : memref<1x4x256xf32, #tpu.memory_space<vmem>>, vector<1x4x256xf32>
    tpu.vector_store %arg4[%c0_14, %c0_15, %c0_16], %26 {strides = array<i32>} : memref<1x4x256xf32, #tpu.memory_space<vmem>>, vector<1x4x256xf32>,
    return
  }
  func.func @transform_0(%arg0: i32) -> (i32, i32, i32) {
    %c0_i32 = arith.constant 0 : i32
    %c0_i32_0 = arith.constant 0 : i32
    %c0_i32_1 = arith.constant 0 : i32
    return %arg0, %c0_i32, %c0_i32_0 : i32, i32, i32
  }
  func.func @transform_1(%arg0: i32) -> (i32, i32) {
    %c0_i32 = arith.constant 0 : i32
    %c0_i32_0 = arith.constant 0 : i32
    %c0_i32_1 = arith.constant 0 : i32
    return %c0_i32, %c0_i32_0 : i32, i32
  }
  func.func @transform_2(%arg0: i32) -> (i32, i32) {
    %c0_i32 = arith.constant 0 : i32
    %c0_i32_0 = arith.constant 0 : i32
    %c0_i32_1 = arith.constant 0 : i32
    return %c0_i32, %c0_i32_0 : i32, i32
  }
  func.func @transform_3(%arg0: i32) -> (i32, i32, i32) {
    %c0_i32 = arith.constant 0 : i32
    %c0_i32_0 = arith.constant 0 : i32
    %c0_i32_1 = arith.constant 0 : i32
    return %arg0, %c0_i32, %c0_i32_0 : i32, i32, i32
  }
}

</mosaic_0001>

<llo_original>
// kernel: tpu_custom_call.1
$region0: #{tpu_custom_call.1}
  #allocation0 [shape = 'u32[]', space=smem, size = 0x4, offset = 0x4, fixed_abs, tag = 'smem constant byte address 0x4 - core index']
  #allocation1 [shape = 'u32[144,128]{1,0:T(1,128)}', space=vmem, size = 0x12000, scoped, tag = 'internal scratch']
  %s0 = inlined_call_operand.hbm [shape: f32[2,4,256], index: 0, kind: input, shape index: {}]
  %s1 = inlined_call_operand.vmem [shape: f32[2,4], index: 1, kind: input, shape index: {}]
  %s2 = inlined_call_operand.vmem [shape: f32[4,2], index: 2, kind: input, shape index: {}]
  %s3 = inlined_call_operand.hbm [shape: f32[2,4,256], index: 3, kind: output, shape index: {}]
  %s4 = sld [smem:[#allocation0]]
  $region49: #{tpu_custom_call.1} parent=0
    _
  %s6 = ssub.s32 1, %s4
  %s7 = scalar_select 0, %s6, %s4
  $region1: #{tpu_custom_call.1} parent=0
    #allocation2 [shape = 'u8[8192]{0}', space=vmem, size = 0x2000, scoped, tag = 'input window, operand 0']
    #allocation3 [shape = 's32[2]{0}', space=sflag, size = 0x8, scoped, tag = 'scoped memory for tpu_custom_call.1']
    #allocation4 [shape = 's32[2]{0}', space=sflag, size = 0x8, scoped, tag = 'scoped memory for tpu_custom_call.1']
    #allocation5 [shape = 'u8[8192]{0}', space=vmem, size = 0x2000, scoped, tag = 'output window, operand 0']
    %8 = vsyncpa [#allocation3], 0
    %s9 = scalar_lea.sflag [#allocation3], 1
    %10 = vsyncpa %s9, 0
    %11 = vsyncpa [#allocation4], 0
    %s12 = scalar_lea.sflag [#allocation4], 1
    %13 = vsyncpa %s12, 0
    loop: start=0, step=1, limit=4
    $region2: #{tpu_custom_call.1} parent=1 // loop_pre_header
      _
    $region3: #{tpu_custom_call.1} parent=1 // loop_header
      %s15 = sphi 0, %s19
      %p16 = scmp.ge.s32.totalorder %s15, 4
      %s25 = sphi 0, %s27
      %s28 = sphi 0, %s25
      %s29 = sphi 0, %s28
      %s45 = sphi 0, %s29
      %s49 = sphi 0, %s49
      %s51 = sphi 0, %s49
      %s52 = sphi 0, %s51
      %s66 = sphi 0, %s52
      %s70 = sphi 0, %s70
      %s72 = sphi 0, %s70
      %s73 = sphi 0, %s72
      %s87 = sphi 0, %s73
      %s93 = sphi 0, %s95
      %s96 = sphi 0, %s93
      %s97 = sphi 0, %s96
      %s113 = sphi 0, %s97
    $region4: #{tpu_custom_call.1} parent=1 // loop_header_branch
      %18 = sbr.rel (%p16) target = $region8
    $region5: #{tpu_custom_call.1} parent=1 // loop_body
      %s20 = ssub.s32 %s15, 1
      %s21 = ssub.s32 %s15, 2
      %s22 = sadd.s32 %s15, 1
      %s23 = ssub.s32 %s15, %s22
      %p24 = scmp.eq.s32.totalorder %s23, 0
      %s26 = sadd.s32 %s25, 1
      %s27 = scalar_select %p24, %s25, %s26
      %p30 = pneg %p24
      %p31 = scmp.eq.s32.totalorder %s15, 1
      %p32 = por %p30, %p31
      %p33 = scmp.ne.s32.totalorder %s25, %s28
      %p34 = scmp.eq.s32.totalorder %s15, 0
      %p35 = por %p33, %p34
      %p36 = scmp.ne.s32.totalorder %s25, %s28
      %p37 = scmp.eq.s32.totalorder %s20, 1
      %p38 = por %p36, %p37
      %p39 = scmp.ne.s32.totalorder %s28, %s29
      %p40 = scmp.eq.s32.totalorder %s20, 0
      %p41 = por %p39, %p40
      %p42 = scmp.ne.s32.totalorder %s28, %s29
      %p43 = scmp.eq.s32.totalorder %s21, 1
      %p44 = por %p42, %p43
      %p46 = scmp.ne.s32.totalorder %s29, %s45
      %p47 = scmp.eq.s32.totalorder %s21, 0
      %p48 = por %p46, %p47
      %s50 = sadd.s32 %s49, 1
      %p53 = scmp.eq.s32.totalorder %s15, 1
      %p54 = scmp.ne.s32.totalorder %s49, %s51
      %p55 = scmp.eq.s32.totalorder %s15, 0
      %p56 = por %p54, %p55
      %p57 = scmp.ne.s32.totalorder %s49, %s51
      %p58 = scmp.eq.s32.totalorder %s20, 1
      %p59 = por %p57, %p58
      %p60 = scmp.ne.s32.totalorder %s51, %s52
      %p61 = scmp.eq.s32.totalorder %s20, 0
      %p62 = por %p60, %p61
      %p63 = scmp.ne.s32.totalorder %s51, %s52
      %p64 = scmp.eq.s32.totalorder %s21, 1
      %p65 = por %p63, %p64
      %p67 = scmp.ne.s32.totalorder %s52, %s66
      %p68 = scmp.eq.s32.totalorder %s21, 0
      %p69 = por %p67, %p68
      %s71 = sadd.s32 %s70, 1
      %p74 = scmp.eq.s32.totalorder %s15, 1
      %p75 = scmp.ne.s32.totalorder %s70, %s72
      %p76 = scmp.eq.s32.totalorder %s15, 0
      %p77 = por %p75, %p76
      %p78 = scmp.ne.s32.totalorder %s70, %s72
      %p79 = scmp.eq.s32.totalorder %s20, 1
      %p80 = por %p78, %p79
      %p81 = scmp.ne.s32.totalorder %s72, %s73
      %p82 = scmp.eq.s32.totalorder %s20, 0
      %p83 = por %p81, %p82
      %p84 = scmp.ne.s32.totalorder %s72, %s73
      %p85 = scmp.eq.s32.totalorder %s21, 1
      %p86 = por %p84, %p85
      %p88 = scmp.ne.s32.totalorder %s73, %s87
      %p89 = scmp.eq.s32.totalorder %s21, 0
      %p90 = por %p88, %p89
      %s91 = ssub.s32 %s15, %s22
      %p92 = scmp.eq.s32.totalorder %s91, 0
      %s94 = sadd.s32 %s93, 1
      %s95 = scalar_select %p92, %s93, %s94
      %p98 = pneg %p92
      %p99 = scmp.eq.s32.totalorder %s15, 1
      %p100 = por %p98, %p99
      %p101 = scmp.ne.s32.totalorder %s93, %s96
      %p102 = scmp.eq.s32.totalorder %s15, 0
      %p103 = por %p101, %p102
      %p104 = scmp.ne.s32.totalorder %s93, %s96
      %p105 = scmp.eq.s32.totalorder %s20, 1
      %p106 = por %p104, %p105
      %p107 = scmp.ne.s32.totalorder %s96, %s97
      %p108 = scmp.eq.s32.totalorder %s20, 0
      %p109 = por %p107, %p108
      %p110 = scmp.ne.s32.totalorder %s96, %s97
      %p111 = scmp.eq.s32.totalorder %s21, 1
      %p112 = por %p110, %p111
      %p114 = scmp.ne.s32.totalorder %s97, %s113
      %p115 = scmp.eq.s32.totalorder %s21, 0
      %p116 = por %p114, %p115
      %p117 = scmp.le.s32.totalorder 1, %s15
      %p118 = scmp.lt.s32.totalorder %s15, 3
      %p119 = pnand %p117, %p118
      %p120 = pneg %p119
      // Predicated region
      $region9: #{tpu_custom_call.1} parent=5 // pred_check
        _
      $region10: #{tpu_custom_call.1} parent=5 // pred_check_branch
        %122 = sbr.rel (%p119) target = $region12
      $region11: #{tpu_custom_call.1} parent=5 // pred_region
        %s123 = ssub.s32 %s15, 1
        // Predicated region
        $region13: #{tpu_custom_call.1} parent=11 // pred_check
          %p124 = pneg %p62
        $region14: #{tpu_custom_call.1} parent=11 // pred_check_branch
          %126 = sbr.rel (%p124) target = $region16
        $region15: #{tpu_custom_call.1} parent=11 // pred_region
          _
        $region16: #{tpu_custom_call.1} parent=11 // pred_fallthru
          _
        // Predicated region
        $region17: #{tpu_custom_call.1} parent=11 // pred_check
          %p127 = pneg %p83
        $region18: #{tpu_custom_call.1} parent=11 // pred_check_branch
          %129 = sbr.rel (%p127) target = $region20
        $region19: #{tpu_custom_call.1} parent=11 // pred_region
          _
        $region20: #{tpu_custom_call.1} parent=11 // pred_fallthru
          _
      $region12: #{tpu_custom_call.1} parent=5 // pred_fallthru
        _
      %p130 = scmp.lt.s32.totalorder %s15, 2
      // Predicated region
      $region21: #{tpu_custom_call.1} parent=5 // pred_check
        %p131 = pneg %p130
      $region22: #{tpu_custom_call.1} parent=5 // pred_check_branch
        %133 = sbr.rel (%p131) target = $region24
      $region23: #{tpu_custom_call.1} parent=5 // pred_region
        // Predicated region
        $region25: #{tpu_custom_call.1} parent=23 // pred_check
          %p134 = pneg %p35
        $region26: #{tpu_custom_call.1} parent=23 // pred_check_branch
          %136 = sbr.rel (%p134) target = $region28
        $region27: #{tpu_custom_call.1} parent=23 // pred_region
          %s137 = sand.u32 %s25, 1
          %s138 = scalar_lea.sflag [#allocation3], %s137
          %s139 = sand.u32 %s25, 1
          %s140 = smul.addr %s139, 8
          %s141 = scalar_lea.vmem [#allocation2], %s140
          %s143 = ssub.s32 128, 128
          %144 = vsyncadd %s138, %s143
          %s145 = smul.addr %s15, 2
          %s146 = smul.addr %s145, 64
          %s147 = scalar_lea.hbm %s0, %s146
          %s149 = sshll.u32 %s141, 4
          %s150 = int_to_ptr.vmem [resolvable:$true] %s149
          %152 = dma.hbm_to_vmem [thread:$0]  %s147, 128, %s150, %s138
        $region28: #{tpu_custom_call.1} parent=23 // pred_fallthru
          _
      $region24: #{tpu_custom_call.1} parent=5 // pred_fallthru
        _
      %p153 = scmp.le.s32.totalorder 1, %s15
      %p154 = scmp.lt.s32.totalorder %s15, 3
      %p155 = pnand %p153, %p154
      %p156 = pneg %p155
      // Predicated region
      $region29: #{tpu_custom_call.1} parent=5 // pred_check
        _
      $region30: #{tpu_custom_call.1} parent=5 // pred_check_branch
        %158 = sbr.rel (%p155) target = $region32
      $region31: #{tpu_custom_call.1} parent=5 // pred_region
        %s159 = ssub.s32 %s15, 1
        %s160 = sand.u32 %s28, 1
        %s161 = scalar_lea.sflag [#allocation3], %s160
        %s162 = sand.u32 %s28, 1
        %s163 = smul.addr %s162, 8
        %s164 = scalar_lea.vmem [#allocation2], %s163
        // Predicated region
        $region33: #{tpu_custom_call.1} parent=31 // pred_check
          %p165 = pneg %p41
        $region34: #{tpu_custom_call.1} parent=31 // pred_check_branch
          %167 = sbr.rel (%p165) target = $region36
        $region35: #{tpu_custom_call.1} parent=31 // pred_region
          %168 = dma.done %s161, 128
        $region36: #{tpu_custom_call.1} parent=31 // pred_fallthru
          _
        %s169 = sand.u32 %s28, 1
        %s170 = scalar_lea.sflag [#allocation3], %s169
        %s171 = sand.u32 %s28, 1
        %s172 = smul.addr %s171, 8
        %s173 = scalar_lea.vmem [#allocation2], %s172
        %p174 = pneg %p41
        %p175 = pneg %p38
        %p176 = pneg %p62
        %p177 = pneg %p59
        %p178 = pneg %p83
        %p179 = pneg %p80
        %p180 = pneg %p109
        %p181 = pneg %p106
        %s182 = sand.u32 %s96, 1
        %s183 = scalar_lea.sflag [#allocation4], %s182
        %s184 = sand.u32 %s96, 1
        %s185 = smul.addr %s184, 8
        %s186 = scalar_lea.vmem [#allocation5], %s185
        %v187 = vld [vmem:[%s164] sm:$0xff]
        %v189 = vcombine.high %v187, %v187
        %vm191 = vcmask 1043456
        %v192 = vsel %vm191, %v187, 0.0
        %v193 = vsel %vm191, %v189, 0.0
        %v194 = vadd.f32 %v192, %v193
        %195 = vadd.xlane.f32.xlu0 %v194
        %v196 = vpop.xlane.xlu0 %195
        %v197 = vmul.f32 %v196, 0.00390625
        %v198 = vld [vmem:[%s1] sm:$0x3]
        %v199 = vld [vmem:[%s2] sm:$0xf]
        %v201 = vlaneseq
        %v202 = vshrl.u32 %v201, 7
        %v203 = vsub.s32 0, %v202
        %v204 = vrot.slane %v198, %v203
        %206 = vbcast.lane.b32.xlu0 %v204, 256
        %v207 = vpop.permute.xlu0 %206
        %v208 = vlaneseq
        %v209 = vshrl.u32 %v208, 7
        %v210 = vsub.s32 1, %v209
        %v211 = vrot.slane %v198, %v210
        %213 = vbcast.lane.b32.xlu0 %v211, 256
        %v214 = vpop.permute.xlu0 %213
        %v217 = vmul.f32 %v197, %v207
        %v218 = vmul.f32 %v197, %v214
        %221 = vset.pattern.permute.xlu0 0
        %222 = vperm.xlu0 %221, %v217
        %v223 = vpop.permute.xlu0 %222
        %224 = vset.pattern.permute.xlu0 0
        %225 = vperm.xlu0 %224, %v218
        %v226 = vpop.permute.xlu0 %225
        %v227 = vlaneseq
        %v228 = vand.u32 %v227, 127
        %v229 = vlaneseq
        %v230 = vshrl.u32 %v229, 7
        %v231 = vsub.s32 %v228, %v230
        %v232 = vrot.slane %v223, %v231
        %v233 = vlaneseq
        %v234 = vshrl.u32 %v233, 7
        %v235 = vsub.s32 %v228, %v234
        %v236 = vrot.slane %v226, %v235
        %vm237 = vcmask 1041409
        %v238 = vsel %vm237, %v236, %v232
        %vm240 = vcmask 25600
        %v241 = vsel %vm240, %v238, 0.0
        %242 = vadd.xlane.f32.xlu0 %v241
        %v243 = vpop.xlane.xlu0 %242
        %v244 = vmax.f32 %v243, 0.0
        %v246 = vlaneseq
        %v247 = vshrl.u32 %v246, 7
        %v248 = vsub.s32 0, %v247
        %v249 = vrot.slane %v199, %v248
        %251 = vbcast.lane.b32.xlu0 %v249, 256
        %v252 = vpop.permute.xlu0 %251
        %v253 = vlaneseq
        %v254 = vshrl.u32 %v253, 7
        %v255 = vsub.s32 1, %v254
        %v256 = vrot.slane %v199, %v255
        %258 = vbcast.lane.b32.xlu0 %v256, 256
        %v259 = vpop.permute.xlu0 %258
        %v260 = vlaneseq
        %v261 = vshrl.u32 %v260, 7
        %v262 = vsub.s32 2, %v261
        %v263 = vrot.slane %v199, %v262
        %265 = vbcast.lane.b32.xlu0 %v263, 256
        %v266 = vpop.permute.xlu0 %265
        %v267 = vlaneseq
        %v268 = vshrl.u32 %v267, 7
        %v269 = vsub.s32 3, %v268
        %v270 = vrot.slane %v199, %v269
        %272 = vbcast.lane.b32.xlu0 %v270, 256
        %v273 = vpop.permute.xlu0 %272
        %v278 = vmul.f32 %v244, %v252
        %v279 = vmul.f32 %v244, %v259
        %v280 = vmul.f32 %v244, %v266
        %v281 = vmul.f32 %v244, %v273
        %286 = vset.pattern.permute.xlu0 0
        %287 = vperm.xlu0 %286, %v278
        %v288 = vpop.permute.xlu0 %287
        %289 = vset.pattern.permute.xlu0 0
        %290 = vperm.xlu0 %289, %v279
        %v291 = vpop.permute.xlu0 %290
        %292 = vset.pattern.permute.xlu0 0
        %293 = vperm.xlu0 %292, %v280
        %v294 = vpop.permute.xlu0 %293
        %295 = vset.pattern.permute.xlu0 0
        %296 = vperm.xlu0 %295, %v281
        %v297 = vpop.permute.xlu0 %296
        %v298 = vlaneseq
        %v299 = vshrl.u32 %v298, 7
        %v300 = vsub.s32 %v228, %v299
        %v301 = vrot.slane %v288, %v300
        %v302 = vlaneseq
        %v303 = vshrl.u32 %v302, 7
        %v304 = vsub.s32 %v228, %v303
        %v305 = vrot.slane %v291, %v304
        %v306 = vlaneseq
        %v307 = vshrl.u32 %v306, 7
        %v308 = vsub.s32 %v228, %v307
        %v309 = vrot.slane %v294, %v308
        %v310 = vlaneseq
        %v311 = vshrl.u32 %v310, 7
        %v312 = vsub.s32 %v228, %v311
        %v313 = vrot.slane %v297, %v312
        %v314 = vsel %vm237, %v305, %v301
        %vm315 = vcmask 1042434
        %v316 = vsel %vm315, %v309, %v314
        %vm317 = vcmask 1043459
        %v318 = vsel %vm317, %v313, %v316
        %vm320 = vcmask 11264
        %v321 = vsel %vm320, %v318, 0.0
        %322 = vadd.xlane.f32.xlu0 %v321
        %v323 = vpop.xlane.xlu0 %322
        %v324 = vxor.u32 %v323, 2147483648
        %v325 = vmul.f32 %v324, 1.442695
        %v326 = vpow.pop %v325
        %v327 = vadd.f32 %v326, 1.0
        %v328 = vrcp.pop %v327
        %v329 = vmul.f32 1.0, %v328
        %v332 = vunpack.c.l.s4 839922192
        %v333 = vunpack.c.0.s8 %v332
        %v334 = vlaneseq
        %v335 = vshrl.u32 %v334, 7
        %v336 = vsub.s32 %v333, %v335
        %v337 = vrot.slane %v329, %v336
        %v339 = vmul.f32 %v187, %v337
        %340 = vst [vmem:[%s186] sm:$0xff] %v339
        %s341 = sand.u32 %s96, 1
        %s342 = scalar_lea.sflag [#allocation4], %s341
        %s343 = sand.u32 %s96, 1
        %s344 = smul.addr %s343, 8
        %s345 = scalar_lea.vmem [#allocation5], %s344
        // Predicated region
        $region37: #{tpu_custom_call.1} parent=31 // pred_check
          %p346 = pneg %p106
        $region38: #{tpu_custom_call.1} parent=31 // pred_check_branch
          %348 = sbr.rel (%p346) target = $region40
        $region39: #{tpu_custom_call.1} parent=31 // pred_region
          %s350 = ssub.s32 128, 128
          %351 = vsyncadd %s342, %s350
          %s352 = smul.addr %s20, 2
          %s353 = smul.addr %s352, 64
          %s354 = scalar_lea.hbm %s3, %s353
          %s356 = sshll.u32 %s345, 4
          %s357 = int_to_ptr.vmem [resolvable:$true] %s356
          %359 = dma.vmem_to_hbm [thread:$0]  %s357, 128, %s354, %s342
        $region40: #{tpu_custom_call.1} parent=31 // pred_fallthru
          _
      $region32: #{tpu_custom_call.1} parent=5 // pred_fallthru
        _
      %p360 = scmp.le.s32.totalorder 2, %s15
      // Predicated region
      $region41: #{tpu_custom_call.1} parent=5 // pred_check
        %p361 = pneg %p360
      $region42: #{tpu_custom_call.1} parent=5 // pred_check_branch
        %363 = sbr.rel (%p361) target = $region44
      $region43: #{tpu_custom_call.1} parent=5 // pred_region
        %s364 = ssub.s32 %s15, 2
        // Predicated region
        $region45: #{tpu_custom_call.1} parent=43 // pred_check
          %p365 = pneg %p112
        $region46: #{tpu_custom_call.1} parent=43 // pred_check_branch
          %367 = sbr.rel (%p365) target = $region48
        $region47: #{tpu_custom_call.1} parent=43 // pred_region
          %s368 = sand.u32 %s97, 1
          %s369 = scalar_lea.sflag [#allocation4], %s368
          %s370 = sand.u32 %s97, 1
          %s371 = smul.addr %s370, 8
          %s372 = scalar_lea.vmem [#allocation5], %s371
          %373 = dma.done %s369, 128
        $region48: #{tpu_custom_call.1} parent=43 // pred_fallthru
          _
      $region44: #{tpu_custom_call.1} parent=5 // pred_fallthru
        _
    $region6: #{tpu_custom_call.1} parent=1 // loop_footer
      %s19 = sadd.s32 1, %s15
    $region7: #{tpu_custom_call.1} parent=1 // loop_footer_branch
      %14 = sbr.rel target = $region3
    $region8: #{tpu_custom_call.1} parent=1 // loop_exit
      _
    %374 = vsyncpa [#allocation3], 1
    %s375 = scalar_lea.sflag [#allocation3], 1
    %376 = vsyncpa %s375, 1
    %377 = vsyncpa [#allocation4], 1
    %s378 = scalar_lea.sflag [#allocation4], 1
    %379 = vsyncpa %s378, 1

</llo_original>
